<compile_context>
chip_gen: v5e
topology: v5e:2x2
jax: 0.10.0
libtpu: 0.0.40
codegen_flags: <defaults>
</compile_context>

<pallas_src>
import math

import jax
import jax.numpy as jnp
import numpy as np
from jax.experimental import pallas as pl
from jax.experimental.pallas import tpu as pltpu

_INV_SQRT2 = 1.0 / math.sqrt(2.0)


def _round_up(a, b):
    return ((a + b - 1) // b) * b


# -----------------------------------------------------------------------------
# Kernel: full forward of the adapter for a tile of rows ([tm, D]).
# -----------------------------------------------------------------------------
def adapter_kernel(x_ref, w1_ref, b1_ref, g_ref, beta_ref, w2_ref, b2_ref,
                   protos_ref, wout_ref, bout_ref, o_ref):
    xmm = x_ref[...]                                        # matmul-operand dtype
    x = xmm.astype(jnp.float32)                             # [tm, D] f32

    # feature_attention: Linear -> LayerNorm -> GELU(exact) -> Linear -> Sigmoid
    h = jnp.dot(xmm, w1_ref[...], preferred_element_type=jnp.float32) + b1_ref[...]
    mu = jnp.mean(h, axis=-1, keepdims=True)
    var = jnp.mean((h - mu) ** 2, axis=-1, keepdims=True)
    h = (h - mu) * jax.lax.rsqrt(var + 1e-5) * g_ref[...] + beta_ref[...]
    h = 0.5 * h * (1.0 + jax.lax.erf(h * _INV_SQRT2))       # exact GELU
    a = jax.nn.sigmoid(
        jnp.dot(h.astype(w2_ref.dtype), w2_ref[...],
                preferred_element_type=jnp.float32) + b2_ref[...])

    # attention-weighted features, L2-normalized (== F.normalize eps=1e-12)
    wf = x * a
    ss = jnp.sum(wf * wf, axis=-1, keepdims=True)
    nf = wf * jax.lax.rsqrt(jnp.maximum(ss, 1e-24))         # [tm, D]

    # fused prototype matmul: [tm, D] @ [D, P*Vg] -> [tm, P*Vg]; every
    # prototype group is a full 128-lane (Vg) slice, so the P-way max is
    # plain full-vreg VPU maxima with no lane extracts.
    sims = jnp.dot(nf.astype(protos_ref.dtype), protos_ref[...],
                   preferred_element_type=jnp.float32)      # [tm, P*Vg]
    Vg = wout_ref.shape[0]
    P = protos_ref.shape[1] // Vg
    m = sims[:, 0:Vg]
    for p in range(1, P):
        m = jnp.maximum(m, sims[:, p * Vg:(p + 1) * Vg])    # [tm, Vg] lane-dense

    # output projection; temperature folded into wout in pack_params, padded
    # wout rows (>= V) are zero so the padded m lanes contribute nothing.
    out = jnp.dot(m.astype(wout_ref.dtype), wout_ref[...],
                  preferred_element_type=jnp.float32) + bout_ref[...]
    o_ref[...] = out.astype(o_ref.dtype)


# -----------------------------------------------------------------------------
# One-time parameter packing (call-invariant; hoisted out of the call path)
# -----------------------------------------------------------------------------
def pack_params(params, *, use_bf16=False):
    """Build kernel-layout parameters once. use_bf16 only on v6e/v7x."""
    D = params["w1_t"].shape[0]
    V = params["wout_t"].shape[0]
    P = params["protos_vpd"].shape[1]
    Vg = _round_up(V, 128)
    mm_dtype = jnp.bfloat16 if use_bf16 else jnp.float32

    # prototypes -> [D, P*Vg], column p*Vg + v holds prototype (v, p); each
    # group zero-padded from V to Vg lanes.
    protos_pvd = jnp.transpose(params["protos_vpd"].astype(jnp.float32), (1, 0, 2))
    protos_pad = jnp.pad(protos_pvd, ((0, 0), (0, Vg - V), (0, 0)))     # [P,Vg,D]
    protos2d = protos_pad.reshape(P * Vg, D).T.astype(mm_dtype)         # [D,P*Vg]

    # temperature folded into the output projection (exact: (m*t)@W == m@(t*W));
    # rows >= V are zero so padded m lanes are inert.
    wout = jnp.zeros((Vg, V), jnp.float32)
    wout = wout.at[:V, :].set(params["wout_t"].astype(jnp.float32) * params["temp"])

    return {
        "mm_dtype": mm_dtype,
        "w1": params["w1_t"].astype(mm_dtype),
        "b1": params["b1"].astype(jnp.float32),
        "ln_g": params["ln_g"].astype(jnp.float32),
        "ln_b": params["ln_b"].astype(jnp.float32),
        "w2": params["w2_t"].astype(mm_dtype),
        "b2": params["b2"].astype(jnp.float32),
        "protos": protos2d,
        "wout": wout.astype(mm_dtype),
        "bout": params["bout"].astype(jnp.float32),
    }


# -----------------------------------------------------------------------------
# Wrapper
# -----------------------------------------------------------------------------
def few_shot_diacritic_adapter(features, packed, *, tm=None):
    """features: [B, S, D] -> logits [B, S, V]. `packed` from pack_params()."""
    B, S, D = features.shape
    V = packed["bout"].shape[1]
    Vg = packed["wout"].shape[0]
    PVg = packed["protos"].shape[1]
    M = B * S

    # Tile selection: 512-row tiles for large M (>=85% of HBM roofline per the
    # pipeline measurements); for small/medium M split into >=2 grid steps so
    # both v7x TensorCores get work.  No padding of x is ever materialized —
    # a ragged tail tile is handled by Pallas boundary masking.
    if tm is None:
        if M >= 1024:
            tm = 512
        else:
            tm = min(_round_up(max(pl.cdiv(M, 2), 1), 8), _round_up(M, 8))
    grid = pl.cdiv(M, tm)

    x = features.reshape(M, D)                  # free, no copy
    if packed["mm_dtype"] == jnp.bfloat16 and x.dtype != jnp.bfloat16:
        # bf16 HBM-traffic knob (v6e/v7x): halves the dominant per-row read.
        x = x.astype(jnp.bfloat16)

    operands = (x, packed["w1"], packed["b1"], packed["ln_g"], packed["ln_b"],
                packed["w2"], packed["b2"], packed["protos"], packed["wout"],
                packed["bout"])

    bytes_accessed = sum(int(a.size) * a.dtype.itemsize for a in operands)
    bytes_accessed += M * V * 4                 # unpadded f32 output
    cost = pl.CostEstimate(
        flops=2 * M * (2 * D * D + D * PVg + Vg * V),
        transcendentals=M * (2 * D + 2),        # erf + sigmoid + 2x rsqrt (advisory)
        bytes_accessed=int(bytes_accessed),
    )

    full = lambda i: (0, 0)
    out = pl.pallas_call(
        adapter_kernel,
        out_shape=jax.ShapeDtypeStruct((M, V), jnp.float32),
        grid_spec=pltpu.PrefetchScalarGridSpec(
            num_scalar_prefetch=0,
            grid=(grid,),
            in_specs=[
                pl.BlockSpec((tm, D), lambda i: (i, 0)),   # x tile
                pl.BlockSpec((D, D), full),                # W1^T
                pl.BlockSpec((1, D), full),                # b1
                pl.BlockSpec((1, D), full),                # ln gamma
                pl.BlockSpec((1, D), full),                # ln beta
                pl.BlockSpec((D, D), full),                # W2^T
                pl.BlockSpec((1, D), full),                # b2
                pl.BlockSpec((D, PVg), full),              # prototypes [D, P*Vg]
                pl.BlockSpec((Vg, V), full),               # temp*Wout^T (row-padded)
                pl.BlockSpec((1, V), full),                # bout
            ],
            out_specs=pl.BlockSpec((tm, V), lambda i: (i, 0)),
        ),
        compiler_params=pltpu.CompilerParams(
            dimension_semantics=("parallel",)),
        cost_estimate=cost,
    )(*operands)

    return out.reshape(B, S, V)                 # free, no copy / no slice pass


# -----------------------------------------------------------------------------
# Deterministic parameter init (mirrors the PyTorch module's __init__)
# -----------------------------------------------------------------------------
def init_params(key, feature_dim, vocab_size, num_prototypes):
    D, V, P = feature_dim, vocab_size, num_prototypes
    keys = jax.random.split(key, 4)

    def xavier_t(k, fan_out, fan_in):
        limit = math.sqrt(6.0 / (fan_in + fan_out))
        # PyTorch Linear weight is [out, in]; we store its transpose [in, out].
        w = jax.random.uniform(k, (fan_out, fan_in), jnp.float32, -limit, limit)
        return w.T

    # prototypes ~ randn, then L2-normalized along the feature dim
    protos = jax.random.normal(keys[0], (V, P, D), jnp.float32)
    protos = protos / jnp.maximum(
        jnp.sqrt(jnp.sum(protos * protos, axis=-1, keepdims=True)), 1e-12)

    return {
        "w1_t": xavier_t(keys[1], D, D),
        "b1": jnp.zeros((1, D), jnp.float32),
        "ln_g": jnp.ones((1, D), jnp.float32),
        "ln_b": jnp.zeros((1, D), jnp.float32),
        "w2_t": xavier_t(keys[2], D, D),
        "b2": jnp.zeros((1, D), jnp.float32),
        "protos_vpd": protos,        # [V, P, D]
        "temp": jnp.float32(10.0),
        "wout_t": xavier_t(keys[3], V, V),
        "bout": jnp.zeros((1, V), jnp.float32),
    }


# -----------------------------------------------------------------------------
# Pure-JAX reference (mirrors the PyTorch forward exactly)
# -----------------------------------------------------------------------------
def reference(features, params):
    x = features
    h = x @ params["w1_t"] + params["b1"]
    mu = jnp.mean(h, axis=-1, keepdims=True)
    var = jnp.mean((h - mu) ** 2, axis=-1, keepdims=True)
    h = (h - mu) * jax.lax.rsqrt(var + 1e-5) * params["ln_g"] + params["ln_b"]
    h = 0.5 * h * (1.0 + jax.lax.erf(h / math.sqrt(2.0)))
    a = jax.nn.sigmoid(h @ params["w2_t"] + params["b2"])
    wf = x * a
    nf = wf / jnp.maximum(
        jnp.sqrt(jnp.sum(wf * wf, axis=-1, keepdims=True)), 1e-12)
    sims = jnp.einsum("bsd,vpd->bsvp", nf, params["protos_vpd"])
    m = jnp.max(sims, axis=-1) * params["temp"]
    return m @ params["wout_t"] + params["bout"]


if __name__ == "__main__":
    B, S, D = 2, 8, 32          # batch, seq_length, feature_dim
    V, P = 16, 5                # diacritic_vocab_size, num_prototypes

    key = jax.random.PRNGKey(0)
    k_feat, k_par = jax.random.split(key)
    features = jax.random.normal(k_feat, (B, S, D), jnp.float32)
    params = init_params(k_par, D, V, P)

    ref = reference(features, params)

    # Pack kernel-layout params ONCE (call-invariant; kept out of the hot path).
    packed_f32 = pack_params(params)                         # default path (all chips)
    logits = jax.block_until_ready(few_shot_diacritic_adapter(features, packed_f32))
    assert logits.shape == (B, S, V)
    np.testing.assert_allclose(np.asarray(logits), np.asarray(ref),
                               rtol=1e-3, atol=1e-3)

    # bf16 operand path (v6e/v7x only; keep f32 on v5e): x + weights in bf16 on
    # the MXU/HBM side, f32 accumulation and f32 LN/GELU/normalize in-kernel.
    packed_bf16 = pack_params(params, use_bf16=True)
    logits_bf16 = jax.block_until_ready(
        few_shot_diacritic_adapter(features, packed_bf16))
    np.testing.assert_allclose(np.asarray(logits_bf16), np.asarray(ref),
                               rtol=1e-1, atol=2e-1)

    print("KERNEL_OK")
</pallas_src>

<mosaic_0001>
module attributes {stable_mosaic.version = 11 : i64} {
  func.func @adapter_kernel(%arg0: i32, %arg1: memref<8x32xf32, #tpu.memory_space<vmem>>, %arg2: memref<32x32xf32, #tpu.memory_space<vmem>>, %arg3: memref<1x32xf32, #tpu.memory_space<vmem>>, %arg4: memref<1x32xf32, #tpu.memory_space<vmem>>, %arg5: memref<1x32xf32, #tpu.memory_space<vmem>>, %arg6: memref<32x32xf32, #tpu.memory_space<vmem>>, %arg7: memref<1x32xf32, #tpu.memory_space<vmem>>, %arg8: memref<32x640xf32, #tpu.memory_space<vmem>>, %arg9: memref<128x16xf32, #tpu.memory_space<vmem>>, %arg10: memref<1x16xf32, #tpu.memory_space<vmem>>, %arg11: memref<8x16xf32, #tpu.memory_space<vmem>>) attributes {dimension_semantics = [#tpu.dimension_semantics<parallel>], iteration_bounds = array<i64: 2>, scalar_prefetch = 0 : i64, scratch_operands = 0 : i64, tpu.core_type = #tpu.core_type<tc>, window_params = [{transform_indices = @transform_0, window_bounds = array<i64: 8, 32>}, {pipeline_mode = #tpu.pipeline_mode<synchronous>, transform_indices = @transform_1, window_bounds = array<i64: 32, 32>}, {pipeline_mode = #tpu.pipeline_mode<synchronous>, transform_indices = @transform_2, window_bounds = array<i64: 1, 32>}, {pipeline_mode = #tpu.pipeline_mode<synchronous>, transform_indices = @transform_3, window_bounds = array<i64: 1, 32>}, {pipeline_mode = #tpu.pipeline_mode<synchronous>, transform_indices = @transform_4, window_bounds = array<i64: 1, 32>}, {pipeline_mode = #tpu.pipeline_mode<synchronous>, transform_indices = @transform_5, window_bounds = array<i64: 32, 32>}, {pipeline_mode = #tpu.pipeline_mode<synchronous>, transform_indices = @transform_6, window_bounds = array<i64: 1, 32>}, {pipeline_mode = #tpu.pipeline_mode<synchronous>, transform_indices = @transform_7, window_bounds = array<i64: 32, 640>}, {pipeline_mode = #tpu.pipeline_mode<synchronous>, transform_indices = @transform_8, window_bounds = array<i64: 128, 16>}, {pipeline_mode = #tpu.pipeline_mode<synchronous>, transform_indices = @transform_9, window_bounds = array<i64: 1, 16>}, {transform_indices = @transform_10, window_bounds = array<i64: 8, 16>}]} {
    %c0 = arith.constant 0 : index
    %c0_0 = arith.constant 0 : index
    %0 = vector.load %arg1[%c0, %c0_0] : memref<8x32xf32, #tpu.memory_space<vmem>>, vector<8x32xf32>
    %c0_1 = arith.constant 0 : index
    %c0_2 = arith.constant 0 : index
    %1 = vector.load %arg2[%c0_1, %c0_2] : memref<32x32xf32, #tpu.memory_space<vmem>>, vector<32x32xf32>
    %cst = arith.constant dense<0.000000e+00> : vector<8x32xf32>
    %2 = tpu.matmul %0, %1, %cst {dimension_numbers = #tpu.dot_dimension_numbers<[1], [0], [0], [1], [0, 0, 1, 1], [], []>} : vector<8x32xf32>, vector<32x32xf32>, vector<8x32xf32> -> vector<8x32xf32>
    %c0_3 = arith.constant 0 : index
    %c0_4 = arith.constant 0 : index
    %3 = vector.load %arg3[%c0_3, %c0_4] : memref<1x32xf32, #tpu.memory_space<vmem>>, vector<1x32xf32>
    %4 = vector.broadcast %3 : vector<1x32xf32> to vector<8x32xf32>
    %5 = arith.addf %2, %4 : vector<8x32xf32>
    %cst_5 = arith.constant dense<0.000000e+00> : vector<8xf32>
    %6 = vector.multi_reduction <add>, %5, %cst_5 [1] : vector<8x32xf32> to vector<8xf32>
    %7 = vector.shape_cast %6 : vector<8xf32> to vector<8x1xf32>
    %cst_6 = arith.constant 3.200000e+01 : f32
    %8 = vector.broadcast %cst_6 : f32 to vector<8x1xf32>
    %9 = arith.divf %7, %8 : vector<8x1xf32>
    %10 = vector.broadcast %9 : vector<8x1xf32> to vector<8x32xf32>
    %11 = arith.subf %5, %10 : vector<8x32xf32>
    %12 = arith.mulf %11, %11 : vector<8x32xf32>
    %cst_7 = arith.constant dense<0.000000e+00> : vector<8xf32>
    %13 = vector.multi_reduction <add>, %12, %cst_7 [1] : vector<8x32xf32> to vector<8xf32>
    %14 = vector.shape_cast %13 : vector<8xf32> to vector<8x1xf32>
    %cst_8 = arith.constant 3.200000e+01 : f32
    %15 = vector.broadcast %cst_8 : f32 to vector<8x1xf32>
    %16 = arith.divf %14, %15 : vector<8x1xf32>
    %17 = vector.broadcast %9 : vector<8x1xf32> to vector<8x32xf32>
    %18 = arith.subf %5, %17 : vector<8x32xf32>
    %cst_9 = arith.constant 9.99999974E-6 : f32
    %19 = vector.broadcast %cst_9 : f32 to vector<8x1xf32>
    %20 = arith.addf %16, %19 : vector<8x1xf32>
    %21 = math.rsqrt %20 : vector<8x1xf32>
    %22 = vector.broadcast %21 : vector<8x1xf32> to vector<8x32xf32>
    %23 = arith.mulf %18, %22 : vector<8x32xf32>
    %c0_10 = arith.constant 0 : index
    %c0_11 = arith.constant 0 : index
    %24 = vector.load %arg4[%c0_10, %c0_11] : memref<1x32xf32, #tpu.memory_space<vmem>>, vector<1x32xf32>
    %25 = vector.broadcast %24 : vector<1x32xf32> to vector<8x32xf32>
    %26 = arith.mulf %23, %25 : vector<8x32xf32>
    %c0_12 = arith.constant 0 : index
    %c0_13 = arith.constant 0 : index
    %27 = vector.load %arg5[%c0_12, %c0_13] : memref<1x32xf32, #tpu.memory_space<vmem>>, vector<1x32xf32>
    %28 = vector.broadcast %27 : vector<1x32xf32> to vector<8x32xf32>
    %29 = arith.addf %26, %28 : vector<8x32xf32>
    %cst_14 = arith.constant 5.000000e-01 : f32
    %30 = vector.broadcast %cst_14 : f32 to vector<8x32xf32>
    %31 = arith.mulf %30, %29 : vector<8x32xf32>
    %cst_15 = arith.constant 0.707106769 : f32
    %32 = vector.broadcast %cst_15 : f32 to vector<8x32xf32>
    %33 = arith.mulf %29, %32 : vector<8x32xf32>
    %34 = math.erf %33 : vector<8x32xf32>
    %cst_16 = arith.constant 1.000000e+00 : f32
    %35 = vector.broadcast %cst_16 : f32 to vector<8x32xf32>
    %36 = arith.addf %35, %34 : vector<8x32xf32>
    %37 = arith.mulf %31, %36 : vector<8x32xf32>
    %c0_17 = arith.constant 0 : index
    %c0_18 = arith.constant 0 : index
    %38 = vector.load %arg6[%c0_17, %c0_18] : memref<32x32xf32, #tpu.memory_space<vmem>>, vector<32x32xf32>
    %cst_19 = arith.constant dense<0.000000e+00> : vector<8x32xf32>
    %39 = tpu.matmul %37, %38, %cst_19 {dimension_numbers = #tpu.dot_dimension_numbers<[1], [0], [0], [1], [0, 0, 1, 1], [], []>} : vector<8x32xf32>, vector<32x32xf32>, vector<8x32xf32> -> vector<8x32xf32>
    %c0_20 = arith.constant 0 : index
    %c0_21 = arith.constant 0 : index
    %40 = vector.load %arg7[%c0_20, %c0_21] : memref<1x32xf32, #tpu.memory_space<vmem>>, vector<1x32xf32>
    %41 = vector.broadcast %40 : vector<1x32xf32> to vector<8x32xf32>
    %42 = arith.addf %39, %41 : vector<8x32xf32>
    %43 = arith.negf %42 : vector<8x32xf32>
    %44 = math.exp %43 : vector<8x32xf32>
    %cst_22 = arith.constant 1.000000e+00 : f32
    %45 = vector.broadcast %cst_22 : f32 to vector<8x32xf32>
    %46 = arith.addf %45, %44 : vector<8x32xf32>
    %47 = arith.divf %45, %46 : vector<8x32xf32>
    %48 = arith.mulf %0, %47 : vector<8x32xf32>
    %49 = arith.mulf %48, %48 : vector<8x32xf32>
    %cst_23 = arith.constant dense<0.000000e+00> : vector<8xf32>
    %50 = vector.multi_reduction <add>, %49, %cst_23 [1] : vector<8x32xf32> to vector<8xf32>
    %51 = vector.shape_cast %50 : vector<8xf32> to vector<8x1xf32>
    %cst_24 = arith.constant 1.000000e-24 : f32
    %52 = vector.broadcast %cst_24 : f32 to vector<8x1xf32>
    %53 = arith.maximumf %51, %52 : vector<8x1xf32>
    %54 = math.rsqrt %53 : vector<8x1xf32>
    %55 = vector.broadcast %54 : vector<8x1xf32> to vector<8x32xf32>
    %56 = arith.mulf %48, %55 : vector<8x32xf32>
    %c0_25 = arith.constant 0 : index
    %c0_26 = arith.constant 0 : index
    %57 = vector.load %arg8[%c0_25, %c0_26] : memref<32x640xf32, #tpu.memory_space<vmem>>, vector<32x640xf32>
    %cst_27 = arith.constant dense<0.000000e+00> : vector<8x640xf32>
    %58 = tpu.matmul %56, %57, %cst_27 {dimension_numbers = #tpu.dot_dimension_numbers<[1], [0], [0], [1], [0, 0, 1, 1], [], []>} : vector<8x32xf32>, vector<32x640xf32>, vector<8x640xf32> -> vector<8x640xf32>
    %59 = vector.extract_strided_slice %58 {offsets = [0, 0], sizes = [8, 128], strides = [1, 1]} : vector<8x640xf32> to vector<8x128xf32>
    %60 = vector.extract_strided_slice %58 {offsets = [0, 128], sizes = [8, 128], strides = [1, 1]} : vector<8x640xf32> to vector<8x128xf32>
    %61 = arith.maximumf %59, %60 : vector<8x128xf32>
    %62 = vector.extract_strided_slice %58 {offsets = [0, 256], sizes = [8, 128], strides = [1, 1]} : vector<8x640xf32> to vector<8x128xf32>
    %63 = arith.maximumf %61, %62 : vector<8x128xf32>
    %64 = vector.extract_strided_slice %58 {offsets = [0, 384], sizes = [8, 128], strides = [1, 1]} : vector<8x640xf32> to vector<8x128xf32>
    %65 = arith.maximumf %63, %64 : vector<8x128xf32>
    %66 = vector.extract_strided_slice %58 {offsets = [0, 512], sizes = [8, 128], strides = [1, 1]} : vector<8x640xf32> to vector<8x128xf32>
    %67 = arith.maximumf %65, %66 : vector<8x128xf32>
    %c0_28 = arith.constant 0 : index
    %c0_29 = arith.constant 0 : index
    %68 = vector.load %arg9[%c0_28, %c0_29] : memref<128x16xf32, #tpu.memory_space<vmem>>, vector<128x16xf32>
    %cst_30 = arith.constant dense<0.000000e+00> : vector<8x16xf32>
    %69 = tpu.matmul %67, %68, %cst_30 {dimension_numbers = #tpu.dot_dimension_numbers<[1], [0], [0], [1], [0, 0, 1, 1], [], []>} : vector<8x128xf32>, vector<128x16xf32>, vector<8x16xf32> -> vector<8x16xf32>
    %c0_31 = arith.constant 0 : index
    %c0_32 = arith.constant 0 : index
    %70 = vector.load %arg10[%c0_31, %c0_32] : memref<1x16xf32, #tpu.memory_space<vmem>>, vector<1x16xf32>
    %71 = vector.broadcast %70 : vector<1x16xf32> to vector<8x16xf32>
    %72 = arith.addf %69, %71 : vector<8x16xf32>
    %c0_33 = arith.constant 0 : index
    %c0_34 = arith.constant 0 : index
    %73 = vector.load %arg11[%c0_33, %c0_34] : memref<8x16xf32, #tpu.memory_space<vmem>>, vector<8x16xf32>
    tpu.vector_store %arg11[%c0_33, %c0_34], %72 {strides = array<i32>} : memref<8x16xf32, #tpu.memory_space<vmem>>, vector<8x16xf32>,
    return
  }
  func.func @transform_0(%arg0: i32) -> (i32, i32) {
    %c0_i32 = arith.constant 0 : i32
    %c0_i32_0 = arith.constant 0 : i32
    return %arg0, %c0_i32 : i32, i32
  }
  func.func @transform_1(%arg0: i32) -> (i32, i32) {
    %c0_i32 = arith.constant 0 : i32
    %c0_i32_0 = arith.constant 0 : i32
    %c0_i32_1 = arith.constant 0 : i32
    return %c0_i32, %c0_i32_0 : i32, i32
  }
  func.func @transform_2(%arg0: i32) -> (i32, i32) {
    %c0_i32 = arith.constant 0 : i32
    %c0_i32_0 = arith.constant 0 : i32
    %c0_i32_1 = arith.constant 0 : i32
    return %c0_i32, %c0_i32_0 : i32, i32
  }
  func.func @transform_3(%arg0: i32) -> (i32, i32) {
    %c0_i32 = arith.constant 0 : i32
    %c0_i32_0 = arith.constant 0 : i32
    %c0_i32_1 = arith.constant 0 : i32
    return %c0_i32, %c0_i32_0 : i32, i32
  }
  func.func @transform_4(%arg0: i32) -> (i32, i32) {
    %c0_i32 = arith.constant 0 : i32
    %c0_i32_0 = arith.constant 0 : i32
    %c0_i32_1 = arith.constant 0 : i32
    return %c0_i32, %c0_i32_0 : i32, i32
  }
  func.func @transform_5(%arg0: i32) -> (i32, i32) {
    %c0_i32 = arith.constant 0 : i32
    %c0_i32_0 = arith.constant 0 : i32
    %c0_i32_1 = arith.constant 0 : i32
    return %c0_i32, %c0_i32_0 : i32, i32
  }
  func.func @transform_6(%arg0: i32) -> (i32, i32) {
    %c0_i32 = arith.constant 0 : i32
    %c0_i32_0 = arith.constant 0 : i32
    %c0_i32_1 = arith.constant 0 : i32
    return %c0_i32, %c0_i32_0 : i32, i32
  }
  func.func @transform_7(%arg0: i32) -> (i32, i32) {
    %c0_i32 = arith.constant 0 : i32
    %c0_i32_0 = arith.constant 0 : i32
    %c0_i32_1 = arith.constant 0 : i32
    return %c0_i32, %c0_i32_0 : i32, i32
  }
  func.func @transform_8(%arg0: i32) -> (i32, i32) {
    %c0_i32 = arith.constant 0 : i32
    %c0_i32_0 = arith.constant 0 : i32
    %c0_i32_1 = arith.constant 0 : i32
    return %c0_i32, %c0_i32_0 : i32, i32
  }
  func.func @transform_9(%arg0: i32) -> (i32, i32) {
    %c0_i32 = arith.constant 0 : i32
    %c0_i32_0 = arith.constant 0 : i32
    %c0_i32_1 = arith.constant 0 : i32
    return %c0_i32, %c0_i32_0 : i32, i32
  }
  func.func @transform_10(%arg0: i32) -> (i32, i32) {
    %c0_i32 = arith.constant 0 : i32
    %c0_i32_0 = arith.constant 0 : i32
    return %arg0, %c0_i32 : i32, i32
  }
}

</mosaic_0001>

<llo_original>
// kernel: tpu_custom_call.1
$region0: #{tpu_custom_call.1}
  #allocation0 [shape = 'u32[]', space=smem, size = 0x4, offset = 0x4, fixed_abs, tag = 'smem constant byte address 0x4 - core index']
  #allocation1 [shape = 'u32[72,128]{1,0:T(1,128)}', space=vmem, size = 0x9000, scoped, tag = 'internal scratch']
  %s0 = inlined_call_operand.vmem [shape: f32[16,32], index: 0, kind: input, shape index: {}]
  %s1 = inlined_call_operand.vmem [shape: f32[32,32], index: 1, kind: input, shape index: {}]
  %s2 = inlined_call_operand.vmem [shape: f32[1,32], index: 2, kind: input, shape index: {}]
  %s3 = inlined_call_operand.vmem [shape: f32[1,32], index: 3, kind: input, shape index: {}]
  %s4 = inlined_call_operand.vmem [shape: f32[1,32], index: 4, kind: input, shape index: {}]
  %s5 = inlined_call_operand.vmem [shape: f32[32,32], index: 5, kind: input, shape index: {}]
  %s6 = inlined_call_operand.vmem [shape: f32[1,32], index: 6, kind: input, shape index: {}]
  %s7 = inlined_call_operand.hbm [shape: f32[32,640], index: 7, kind: input, shape index: {}]
  %s8 = inlined_call_operand.vmem [shape: f32[128,16], index: 8, kind: input, shape index: {}]
  %s9 = inlined_call_operand.vmem [shape: f32[1,16], index: 9, kind: input, shape index: {}]
  %s10 = inlined_call_operand.hbm [shape: f32[16,16], index: 10, kind: output, shape index: {}]
  %s11 = sld [smem:[#allocation0]]
  $region77: #{tpu_custom_call.1} parent=0
    _
  %s13 = ssub.s32 1, %s11
  %s14 = scalar_select 0, %s13, %s11
  $region1: #{tpu_custom_call.1} parent=0
    #allocation2 [shape = 'u8[81920]{0}', space=vmem, size = 0x14000, scoped, tag = 'input window, operand 7, single buffered']
    #allocation3 [shape = 's32[2]{0}', space=sflag, size = 0x8, scoped, tag = 'scoped memory for tpu_custom_call.1']
    #allocation4 [shape = 's32[2]{0}', space=sflag, size = 0x8, scoped, tag = 'scoped memory for tpu_custom_call.1']
    #allocation5 [shape = 'u8[8192]{0}', space=vmem, size = 0x2000, scoped, tag = 'output window, operand 0']
    %15 = vsyncpa [#allocation3], 0
    %16 = vsyncpa [#allocation4], 0
    %s17 = scalar_lea.sflag [#allocation4], 1
    %18 = vsyncpa %s17, 0
    loop: start=0, step=1, limit=4
    $region2: #{tpu_custom_call.1} parent=1 // loop_pre_header
      _
    $region3: #{tpu_custom_call.1} parent=1 // loop_header
      %s20 = sphi 0, %s24
      %p21 = scmp.ge.s32.totalorder %s20, 4
      %s30 = sphi 0, %s32
      %s33 = sphi 0, %s30
      %s34 = sphi 0, %s33
      %s50 = sphi 0, %s34
      %s54 = sphi 0, %s54
      %s56 = sphi 0, %s54
      %s57 = sphi 0, %s56
      %s71 = sphi 0, %s57
      %s75 = sphi 0, %s75
      %s77 = sphi 0, %s75
      %s78 = sphi 0, %s77
      %s92 = sphi 0, %s78
      %s96 = sphi 0, %s96
      %s98 = sphi 0, %s96
      %s99 = sphi 0, %s98
      %s113 = sphi 0, %s99
      %s117 = sphi 0, %s117
      %s119 = sphi 0, %s117
      %s120 = sphi 0, %s119
      %s134 = sphi 0, %s120
      %s138 = sphi 0, %s138
      %s140 = sphi 0, %s138
      %s141 = sphi 0, %s140
      %s155 = sphi 0, %s141
      %s159 = sphi 0, %s159
      %s161 = sphi 0, %s159
      %s162 = sphi 0, %s161
      %s176 = sphi 0, %s162
      %s180 = sphi 0, %s180
      %s182 = sphi 0, %s180
      %s183 = sphi 0, %s182
      %s197 = sphi 0, %s183
      %s201 = sphi 0, %s201
      %s203 = sphi 0, %s201
      %s204 = sphi 0, %s203
      %s218 = sphi 0, %s204
      %s222 = sphi 0, %s222
      %s224 = sphi 0, %s222
      %s225 = sphi 0, %s224
      %s239 = sphi 0, %s225
      %s245 = sphi 0, %s247
      %s248 = sphi 0, %s245
      %s249 = sphi 0, %s248
      %s265 = sphi 0, %s249
    $region4: #{tpu_custom_call.1} parent=1 // loop_header_branch
      %23 = sbr.rel (%p21) target = $region8
    $region5: #{tpu_custom_call.1} parent=1 // loop_body
      %s25 = ssub.s32 %s20, 1
      %s26 = ssub.s32 %s20, 2
      %s27 = sadd.s32 %s20, 1
      %s28 = ssub.s32 %s20, %s27
      %p29 = scmp.eq.s32.totalorder %s28, 0
      %s31 = sadd.s32 %s30, 1
      %s32 = scalar_select %p29, %s30, %s31
      %p35 = pneg %p29
      %p36 = scmp.eq.s32.totalorder %s20, 1
      %p37 = por %p35, %p36
      %p38 = scmp.ne.s32.totalorder %s30, %s33
      %p39 = scmp.eq.s32.totalorder %s20, 0
      %p40 = por %p38, %p39
      %p41 = scmp.ne.s32.totalorder %s30, %s33
      %p42 = scmp.eq.s32.totalorder %s25, 1
      %p43 = por %p41, %p42
      %p44 = scmp.ne.s32.totalorder %s33, %s34
      %p45 = scmp.eq.s32.totalorder %s25, 0
      %p46 = por %p44, %p45
      %p47 = scmp.ne.s32.totalorder %s33, %s34
      %p48 = scmp.eq.s32.totalorder %s26, 1
      %p49 = por %p47, %p48
      %p51 = scmp.ne.s32.totalorder %s34, %s50
      %p52 = scmp.eq.s32.totalorder %s26, 0
      %p53 = por %p51, %p52
      %s55 = sadd.s32 %s54, 1
      %p58 = scmp.eq.s32.totalorder %s20, 1
      %p59 = scmp.ne.s32.totalorder %s54, %s56
      %p60 = scmp.eq.s32.totalorder %s20, 0
      %p61 = por %p59, %p60
      %p62 = scmp.ne.s32.totalorder %s54, %s56
      %p63 = scmp.eq.s32.totalorder %s25, 1
      %p64 = por %p62, %p63
      %p65 = scmp.ne.s32.totalorder %s56, %s57
      %p66 = scmp.eq.s32.totalorder %s25, 0
      %p67 = por %p65, %p66
      %p68 = scmp.ne.s32.totalorder %s56, %s57
      %p69 = scmp.eq.s32.totalorder %s26, 1
      %p70 = por %p68, %p69
      %p72 = scmp.ne.s32.totalorder %s57, %s71
      %p73 = scmp.eq.s32.totalorder %s26, 0
      %p74 = por %p72, %p73
      %s76 = sadd.s32 %s75, 1
      %p79 = scmp.eq.s32.totalorder %s20, 1
      %p80 = scmp.ne.s32.totalorder %s75, %s77
      %p81 = scmp.eq.s32.totalorder %s20, 0
      %p82 = por %p80, %p81
      %p83 = scmp.ne.s32.totalorder %s75, %s77
      %p84 = scmp.eq.s32.totalorder %s25, 1
      %p85 = por %p83, %p84
      %p86 = scmp.ne.s32.totalorder %s77, %s78
      %p87 = scmp.eq.s32.totalorder %s25, 0
      %p88 = por %p86, %p87
      %p89 = scmp.ne.s32.totalorder %s77, %s78
      %p90 = scmp.eq.s32.totalorder %s26, 1
      %p91 = por %p89, %p90
      %p93 = scmp.ne.s32.totalorder %s78, %s92
      %p94 = scmp.eq.s32.totalorder %s26, 0
      %p95 = por %p93, %p94
      %s97 = sadd.s32 %s96, 1
      %p100 = scmp.eq.s32.totalorder %s20, 1
      %p101 = scmp.ne.s32.totalorder %s96, %s98
      %p102 = scmp.eq.s32.totalorder %s20, 0
      %p103 = por %p101, %p102
      %p104 = scmp.ne.s32.totalorder %s96, %s98
      %p105 = scmp.eq.s32.totalorder %s25, 1
      %p106 = por %p104, %p105
      %p107 = scmp.ne.s32.totalorder %s98, %s99
      %p108 = scmp.eq.s32.totalorder %s25, 0
      %p109 = por %p107, %p108
      %p110 = scmp.ne.s32.totalorder %s98, %s99
      %p111 = scmp.eq.s32.totalorder %s26, 1
      %p112 = por %p110, %p111
      %p114 = scmp.ne.s32.totalorder %s99, %s113
      %p115 = scmp.eq.s32.totalorder %s26, 0
      %p116 = por %p114, %p115
      %s118 = sadd.s32 %s117, 1
      %p121 = scmp.eq.s32.totalorder %s20, 1
      %p122 = scmp.ne.s32.totalorder %s117, %s119
      %p123 = scmp.eq.s32.totalorder %s20, 0
      %p124 = por %p122, %p123
      %p125 = scmp.ne.s32.totalorder %s117, %s119
      %p126 = scmp.eq.s32.totalorder %s25, 1
      %p127 = por %p125, %p126
      %p128 = scmp.ne.s32.totalorder %s119, %s120
      %p129 = scmp.eq.s32.totalorder %s25, 0
      %p130 = por %p128, %p129
      %p131 = scmp.ne.s32.totalorder %s119, %s120
      %p132 = scmp.eq.s32.totalorder %s26, 1
      %p133 = por %p131, %p132
      %p135 = scmp.ne.s32.totalorder %s120, %s134
      %p136 = scmp.eq.s32.totalorder %s26, 0
      %p137 = por %p135, %p136
      %s139 = sadd.s32 %s138, 1
      %p142 = scmp.eq.s32.totalorder %s20, 1
      %p143 = scmp.ne.s32.totalorder %s138, %s140
      %p144 = scmp.eq.s32.totalorder %s20, 0
      %p145 = por %p143, %p144
      %p146 = scmp.ne.s32.totalorder %s138, %s140
      %p147 = scmp.eq.s32.totalorder %s25, 1
      %p148 = por %p146, %p147
      %p149 = scmp.ne.s32.totalorder %s140, %s141
      %p150 = scmp.eq.s32.totalorder %s25, 0
      %p151 = por %p149, %p150
      %p152 = scmp.ne.s32.totalorder %s140, %s141
      %p153 = scmp.eq.s32.totalorder %s26, 1
      %p154 = por %p152, %p153
      %p156 = scmp.ne.s32.totalorder %s141, %s155
      %p157 = scmp.eq.s32.totalorder %s26, 0
      %p158 = por %p156, %p157
      %s160 = sadd.s32 %s159, 1
      %p163 = scmp.eq.s32.totalorder %s20, 1
      %p164 = scmp.ne.s32.totalorder %s159, %s161
      %p165 = scmp.eq.s32.totalorder %s20, 0
      %p166 = por %p164, %p165
      %p167 = scmp.ne.s32.totalorder %s159, %s161
      %p168 = scmp.eq.s32.totalorder %s25, 1
      %p169 = por %p167, %p168
      %p170 = scmp.ne.s32.totalorder %s161, %s162
      %p171 = scmp.eq.s32.totalorder %s25, 0
      %p172 = por %p170, %p171
      %p173 = scmp.ne.s32.totalorder %s161, %s162
      %p174 = scmp.eq.s32.totalorder %s26, 1
      %p175 = por %p173, %p174
      %p177 = scmp.ne.s32.totalorder %s162, %s176
      %p178 = scmp.eq.s32.totalorder %s26, 0
      %p179 = por %p177, %p178
      %s181 = sadd.s32 %s180, 1
      %p184 = scmp.eq.s32.totalorder %s20, 1
      %p185 = scmp.ne.s32.totalorder %s180, %s182
      %p186 = scmp.eq.s32.totalorder %s20, 0
      %p187 = por %p185, %p186
      %p188 = scmp.ne.s32.totalorder %s180, %s182
      %p189 = scmp.eq.s32.totalorder %s25, 1
      %p190 = por %p188, %p189
      %p191 = scmp.ne.s32.totalorder %s182, %s183
      %p192 = scmp.eq.s32.totalorder %s25, 0
      %p193 = por %p191, %p192
      %p194 = scmp.ne.s32.totalorder %s182, %s183
      %p195 = scmp.eq.s32.totalorder %s26, 1
      %p196 = por %p194, %p195
      %p198 = scmp.ne.s32.totalorder %s183, %s197
      %p199 = scmp.eq.s32.totalorder %s26, 0
      %p200 = por %p198, %p199
      %s202 = sadd.s32 %s201, 1
      %p205 = scmp.eq.s32.totalorder %s20, 1
      %p206 = scmp.ne.s32.totalorder %s201, %s203
      %p207 = scmp.eq.s32.totalorder %s20, 0
      %p208 = por %p206, %p207
      %p209 = scmp.ne.s32.totalorder %s201, %s203
      %p210 = scmp.eq.s32.totalorder %s25, 1
      %p211 = por %p209, %p210
      %p212 = scmp.ne.s32.totalorder %s203, %s204
      %p213 = scmp.eq.s32.totalorder %s25, 0
      %p214 = por %p212, %p213
      %p215 = scmp.ne.s32.totalorder %s203, %s204
      %p216 = scmp.eq.s32.totalorder %s26, 1
      %p217 = por %p215, %p216
      %p219 = scmp.ne.s32.totalorder %s204, %s218
      %p220 = scmp.eq.s32.totalorder %s26, 0
      %p221 = por %p219, %p220
      %s223 = sadd.s32 %s222, 1
      %p226 = scmp.eq.s32.totalorder %s20, 1
      %p227 = scmp.ne.s32.totalorder %s222, %s224
      %p228 = scmp.eq.s32.totalorder %s20, 0
      %p229 = por %p227, %p228
      %p230 = scmp.ne.s32.totalorder %s222, %s224
      %p231 = scmp.eq.s32.totalorder %s25, 1
      %p232 = por %p230, %p231
      %p233 = scmp.ne.s32.totalorder %s224, %s225
      %p234 = scmp.eq.s32.totalorder %s25, 0
      %p235 = por %p233, %p234
      %p236 = scmp.ne.s32.totalorder %s224, %s225
      %p237 = scmp.eq.s32.totalorder %s26, 1
      %p238 = por %p236, %p237
      %p240 = scmp.ne.s32.totalorder %s225, %s239
      %p241 = scmp.eq.s32.totalorder %s26, 0
      %p242 = por %p240, %p241
      %s243 = ssub.s32 %s20, %s27
      %p244 = scmp.eq.s32.totalorder %s243, 0
      %s246 = sadd.s32 %s245, 1
      %s247 = scalar_select %p244, %s245, %s246
      %p250 = pneg %p244
      %p251 = scmp.eq.s32.totalorder %s20, 1
      %p252 = por %p250, %p251
      %p253 = scmp.ne.s32.totalorder %s245, %s248
      %p254 = scmp.eq.s32.totalorder %s20, 0
      %p255 = por %p253, %p254
      %p256 = scmp.ne.s32.totalorder %s245, %s248
      %p257 = scmp.eq.s32.totalorder %s25, 1
      %p258 = por %p256, %p257
      %p259 = scmp.ne.s32.totalorder %s248, %s249
      %p260 = scmp.eq.s32.totalorder %s25, 0
      %p261 = por %p259, %p260
      %p262 = scmp.ne.s32.totalorder %s248, %s249
      %p263 = scmp.eq.s32.totalorder %s26, 1
      %p264 = por %p262, %p263
      %p266 = scmp.ne.s32.totalorder %s249, %s265
      %p267 = scmp.eq.s32.totalorder %s26, 0
      %p268 = por %p266, %p267
      %p269 = scmp.le.s32.totalorder 1, %s20
      %p270 = scmp.lt.s32.totalorder %s20, 3
      %p271 = pnand %p269, %p270
      %p272 = pneg %p271
      // Predicated region
      $region9: #{tpu_custom_call.1} parent=5 // pred_check
        _
      $region10: #{tpu_custom_call.1} parent=5 // pred_check_branch
        %274 = sbr.rel (%p271) target = $region12
      $region11: #{tpu_custom_call.1} parent=5 // pred_region
        %s275 = ssub.s32 %s20, 1
        // Predicated region
        $region13: #{tpu_custom_call.1} parent=11 // pred_check
          %p276 = pneg %p67
        $region14: #{tpu_custom_call.1} parent=11 // pred_check_branch
          %278 = sbr.rel (%p276) target = $region16
        $region15: #{tpu_custom_call.1} parent=11 // pred_region
          _
        $region16: #{tpu_custom_call.1} parent=11 // pred_fallthru
          _
        // Predicated region
        $region17: #{tpu_custom_call.1} parent=11 // pred_check
          %p279 = pneg %p88
        $region18: #{tpu_custom_call.1} parent=11 // pred_check_branch
          %281 = sbr.rel (%p279) target = $region20
        $region19: #{tpu_custom_call.1} parent=11 // pred_region
          _
        $region20: #{tpu_custom_call.1} parent=11 // pred_fallthru
          _
        // Predicated region
        $region21: #{tpu_custom_call.1} parent=11 // pred_check
          %p282 = pneg %p109
        $region22: #{tpu_custom_call.1} parent=11 // pred_check_branch
          %284 = sbr.rel (%p282) target = $region24
        $region23: #{tpu_custom_call.1} parent=11 // pred_region
          _
        $region24: #{tpu_custom_call.1} parent=11 // pred_fallthru
          _
        // Predicated region
        $region25: #{tpu_custom_call.1} parent=11 // pred_check
          %p285 = pneg %p130
        $region26: #{tpu_custom_call.1} parent=11 // pred_check_branch
          %287 = sbr.rel (%p285) target = $region28
        $region27: #{tpu_custom_call.1} parent=11 // pred_region
          _
        $region28: #{tpu_custom_call.1} parent=11 // pred_fallthru
          _
        // Predicated region
        $region29: #{tpu_custom_call.1} parent=11 // pred_check
          %p288 = pneg %p151
        $region30: #{tpu_custom_call.1} parent=11 // pred_check_branch
          %290 = sbr.rel (%p288) target = $region32
        $region31: #{tpu_custom_call.1} parent=11 // pred_region
          _
        $region32: #{tpu_custom_call.1} parent=11 // pred_fallthru
          _
        // Predicated region
        $region33: #{tpu_custom_call.1} parent=11 // pred_check
          %p291 = pneg %p172
        $region34: #{tpu_custom_call.1} parent=11 // pred_check_branch
          %293 = sbr.rel (%p291) target = $region36
        $region35: #{tpu_custom_call.1} parent=11 // pred_region
          _
        $region36: #{tpu_custom_call.1} parent=11 // pred_fallthru
          _
        // Predicated region
        $region37: #{tpu_custom_call.1} parent=11 // pred_check
          %p294 = pneg %p193
        $region38: #{tpu_custom_call.1} parent=11 // pred_check_branch
          %296 = sbr.rel (%p294) target = $region40
        $region39: #{tpu_custom_call.1} parent=11 // pred_region
          %298 = vsyncadd [#allocation3], 0
          %s299 = sshll.u32 %s7, 4
          %s300 = int_to_ptr.hbm [resolvable:$true] %s299
          %s301 = sshll.u32 [#allocation2], 4
          %s302 = int_to_ptr.vmem [resolvable:$true] %s301
          %307 = dma.hbm_to_vmem [thread:$0]  %s300, 2560, %s302, [#allocation3], 640, 640, 40
        $region40: #{tpu_custom_call.1} parent=11 // pred_fallthru
          _
        // Predicated region
        $region41: #{tpu_custom_call.1} parent=11 // pred_check
          %p308 = pneg %p214
        $region42: #{tpu_custom_call.1} parent=11 // pred_check_branch
          %310 = sbr.rel (%p308) target = $region44
        $region43: #{tpu_custom_call.1} parent=11 // pred_region
          _
        $region44: #{tpu_custom_call.1} parent=11 // pred_fallthru
          _
        // Predicated region
        $region45: #{tpu_custom_call.1} parent=11 // pred_check
          %p311 = pneg %p235
        $region46: #{tpu_custom_call.1} parent=11 // pred_check_branch
          %313 = sbr.rel (%p311) target = $region48
        $region47: #{tpu_custom_call.1} parent=11 // pred_region
          _
        $region48: #{tpu_custom_call.1} parent=11 // pred_fallthru
          _
      $region12: #{tpu_custom_call.1} parent=5 // pred_fallthru
        _
      %p314 = scmp.lt.s32.totalorder %s20, 2
      // Predicated region
      $region49: #{tpu_custom_call.1} parent=5 // pred_check
        %p315 = pneg %p314
      $region50: #{tpu_custom_call.1} parent=5 // pred_check_branch
        %317 = sbr.rel (%p315) target = $region52
      $region51: #{tpu_custom_call.1} parent=5 // pred_region
        // Predicated region
        $region53: #{tpu_custom_call.1} parent=51 // pred_check
          %p318 = pneg %p40
        $region54: #{tpu_custom_call.1} parent=51 // pred_check_branch
          %320 = sbr.rel (%p318) target = $region56
        $region55: #{tpu_custom_call.1} parent=51 // pred_region
          %p321 = scmp.lt.s32.totalorder %s20, 1
          %s322 = scalar_select %p321, %s20, 1
          %s323 = smul.addr %s322, 8
          %s324 = scalar_lea.vmem %s0, %s323
        $region56: #{tpu_custom_call.1} parent=51 // pred_fallthru
          _
      $region52: #{tpu_custom_call.1} parent=5 // pred_fallthru
        _
      %p325 = scmp.le.s32.totalorder 1, %s20
      %p326 = scmp.lt.s32.totalorder %s20, 3
      %p327 = pnand %p325, %p326
      %p328 = pneg %p327
      // Predicated region
      $region57: #{tpu_custom_call.1} parent=5 // pred_check
        _
      $region58: #{tpu_custom_call.1} parent=5 // pred_check_branch
        %330 = sbr.rel (%p327) target = $region60
      $region59: #{tpu_custom_call.1} parent=5 // pred_region
        %s331 = ssub.s32 %s20, 1
        // Predicated region
        $region61: #{tpu_custom_call.1} parent=59 // pred_check
          %p332 = pneg %p193
        $region62: #{tpu_custom_call.1} parent=59 // pred_check_branch
          %334 = sbr.rel (%p332) target = $region64
        $region63: #{tpu_custom_call.1} parent=59 // pred_region
          %336 = dma.done [#allocation3], 2560
        $region64: #{tpu_custom_call.1} parent=59 // pred_fallthru
          _
        %p337 = scmp.lt.s32.totalorder %s25, 1
        %s338 = scalar_select %p337, %s25, 1
        %s339 = smul.addr %s338, 8
        %s340 = scalar_lea.vmem %s0, %s339
        %p341 = pneg %p46
        %p342 = pneg %p43
        %p343 = pneg %p67
        %p344 = pneg %p64
        %p345 = pneg %p88
        %p346 = pneg %p85
        %p347 = pneg %p109
        %p348 = pneg %p106
        %p349 = pneg %p130
        %p350 = pneg %p127
        %p351 = pneg %p151
        %p352 = pneg %p148
        %p353 = pneg %p172
        %p354 = pneg %p169
        %p355 = pneg %p193
        %p356 = pneg %p190
        %p357 = pneg %p214
        %p358 = pneg %p211
        %p359 = pneg %p235
        %p360 = pneg %p232
        %p361 = pneg %p261
        %p362 = pneg %p258
        %s363 = sand.u32 %s248, 1
        %s364 = scalar_lea.sflag [#allocation4], %s363
        %s365 = sand.u32 %s248, 1
        %s366 = smul.addr %s365, 8
        %s367 = scalar_lea.vmem [#allocation5], %s366
        %p368 = scmp.lt.s32.totalorder %s25, 1
        %s369 = scalar_select %p368, %s25, 1
        %s370 = smul.addr %s369, 8
        %s371 = scalar_lea.vmem %s0, %s370
        %v372 = vld [vmem:[%s371] sm:$0xff]
        %v373 = vld [vmem:[%s1] sm:$0xff]
        %v374 = vld [vmem:[%s1 + $0x8] sm:$0xff]
        %v375 = vld [vmem:[%s1 + $0x10] sm:$0xff]
        %v376 = vld [vmem:[%s1 + $0x18] sm:$0xff]
        %v377 = vld [vmem:[%s2] sm:$0x1]
        %v379 = vperm.slane %v377, 0
        %vm381 = vcmask 261120
        %v383 = vsel %vm381, %v372, 0
        %385 = vmatpush.msra.mxu0 0.0
        %386 = vmatpush.msra.mxu0 0.0
        %387 = vmatpush.msra.mxu0 0.0
        %388 = vmatpush.msra.mxu0 0.0
        %389 = vmatpush.msra.mxu0 0.0
        %390 = vmatpush.msra.mxu0 0.0
        %391 = vmatpush.msra.mxu0 0.0
        %392 = vmatpush.msra.mxu0 0.0
        %393 = vmatpush.msra.mxu0 0.0
        %394 = vmatpush.msra.mxu0 0.0
        %395 = vmatpush.msra.mxu0 0.0
        %396 = vmatpush.msra.mxu0 0.0
        %397 = vmatpush.msra.mxu0 %v376
        %398 = vmatpush.msra.mxu0 %v375
        %399 = vmatpush.msra.mxu0 %v374
        %400 = vmatpush.msra.mxu0 %v373
        %401 = vmatmul.f32.gmra.mxu0 %v383
        %v402 = vpop.f32.mrf.mxu0
        %v403 = vadd.f32 %v379, %v402
        %404 = vdwg.mxu0
        %v405 = vsel %vm381, %v403, 0.0
        %406 = vadd.xlane.f32.xlu0 %v405
        %v407 = vpop.xlane.xlu0 %406
        %v408 = vrcp.pop 32.0
        %v409 = vmul.f32 32.0, %v408
        %v410 = vsub.f32 1.0, %v409
        %v411 = vmul.f32 %v408, %v410
        %v412 = vadd.f32 %v408, %v411
        %vm413 = vweird.f32 %v408
        %v414 = vsel %vm413, %v408, %v412
        %v415 = vmul.f32 %v407, %v414
        %v416 = vsub.f32 %v403, %v415
        %v417 = vmul.f32 %v416, %v416
        %v418 = vsel %vm381, %v417, 0.0
        %419 = vadd.xlane.f32.xlu0 %v418
        %v420 = vpop.xlane.xlu0 %419
        %v421 = vmul.f32 %v420, %v414
        %v422 = vadd.f32 %v421, 1e-05
        %v423 = vrsqrt.pop %v422
        %v424 = vmul.f32 %v423, %v422
        %v425 = vmul.f32 %v424, %v423
        %v426 = vmul.f32 0.5, %v425
        %v427 = vsub.f32 1.5, %v426
        %v428 = vmul.f32 %v423, %v427
        %vm429 = vweird.f32 %v422
        %vm430 = vweird.f32 %v423
        %vm431 = vmor %vm429, %vm430
        %v432 = vsel %vm431, %v423, %v428
        %v433 = vmul.f32 %v416, %v432
        %v434 = vld [vmem:[%s3] sm:$0x1]
        %v436 = vperm.slane %v434, 0
        %v438 = vmul.f32 %v433, %v436
        %v439 = vld [vmem:[%s4] sm:$0x1]
        %v441 = vperm.slane %v439, 0
        %v443 = vadd.f32 %v438, %v441
        %v444 = vmul.f32 %v443, 0.5
        %v445 = vmul.f32 %v443, 0.70710677
        %v446 = vmul.f32 %v445, %v445
        %v447 = vmin.f32 16.0, %v446
        %v448 = vmul.f32 %v447, 2.1237322e-06
        %v449 = vadd.f32 %v448, 0.00028619796
        %v450 = vmul.f32 %v447, %v449
        %v451 = vadd.f32 %v450, 0.0036580483
        %v452 = vmul.f32 %v447, %v451
        %v453 = vadd.f32 %v452, 0.05243302
        %v454 = vmul.f32 %v447, %v453
        %v455 = vadd.f32 %v454, 0.18741608
        %v456 = vmul.f32 %v447, %v455
        %v457 = vadd.f32 %v456, 1.1283791
        %v458 = vmul.f32 %v445, %v457
        %v459 = vmul.f32 %v447, 3.8918573e-05
        %v460 = vadd.f32 %v459, 0.001143296
        %v461 = vmul.f32 %v447, %v460
        %v462 = vadd.f32 %v461, 0.014752088
        %v463 = vmul.f32 %v447, %v462
        %v464 = vadd.f32 %v463, 0.112945676
        %v465 = vmul.f32 %v447, %v464
        %v466 = vadd.f32 %v465, 0.4994258
        %v467 = vmul.f32 %v447, %v466
        %v468 = vadd.f32 %v467, 1.0
        %v469 = vrcp.pop %v468
        %v470 = vmul.f32 %v468, %v469
        %v471 = vsub.f32 1.0, %v470
        %v472 = vmul.f32 %v469, %v471
        %v473 = vadd.f32 %v469, %v472
        %vm474 = vweird.f32 %v468
        %vm475 = vweird.f32 %v469
        %vm476 = vmor %vm474, %vm475
        %v477 = vsel %vm476, %v469, %v473
        %v478 = vand.u32 2147483647, %v468
        %vm479 = vcmp.eq.f32.partialorder %v478, 8.507059e+37
        %v480 = vand.u32 %v468, 2147483648
        %v481 = vor.u32 1.1754944e-38, %v480
        %v482 = vsel %vm479, %v481, %v477
        %v483 = vmul.f32 %v458, %v482
        %v484 = vmin.f32 %v483, 1.0
        %v485 = vmax.f32 %v484, -1.0
        %v486 = vadd.f32 %v485, 1.0
        %v487 = vmul.f32 %v444, %v486
        %v488 = vld [vmem:[%s5] sm:$0xff]
        %v489 = vld [vmem:[%s5 + $0x8] sm:$0xff]
        %v490 = vld [vmem:[%s5 + $0x10] sm:$0xff]
        %v491 = vld [vmem:[%s5 + $0x18] sm:$0xff]
        %v492 = vld [vmem:[%s6] sm:$0x1]
        %v494 = vperm.slane %v492, 0
        %v497 = vsel %vm381, %v487, 0
        %499 = vmatpush.msra.mxu0 0.0
        %500 = vmatpush.msra.mxu0 0.0
        %501 = vmatpush.msra.mxu0 0.0
        %502 = vmatpush.msra.mxu0 0.0
        %503 = vmatpush.msra.mxu0 0.0
        %504 = vmatpush.msra.mxu0 0.0
        %505 = vmatpush.msra.mxu0 0.0
        %506 = vmatpush.msra.mxu0 0.0
        %507 = vmatpush.msra.mxu0 0.0
        %508 = vmatpush.msra.mxu0 0.0
        %509 = vmatpush.msra.mxu0 0.0
        %510 = vmatpush.msra.mxu0 0.0
        %511 = vmatpush.msra.mxu0 %v491
        %512 = vmatpush.msra.mxu0 %v490
        %513 = vmatpush.msra.mxu0 %v489
        %514 = vmatpush.msra.mxu0 %v488
        %515 = vmatmul.f32.gmra.mxu0 %v497
        %v516 = vpop.f32.mrf.mxu0
        %v517 = vadd.f32 %v494, %v516
        %518 = vdwg.mxu0
        %v519 = vxor.u32 %v517, 2147483648
        %v520 = vmul.f32 %v519, 1.442695
        %v521 = vpow.pop %v520
        %v522 = vadd.f32 %v521, 1.0
        %v523 = vrcp.pop %v522
        %v524 = vmul.f32 %v522, %v523
        %v525 = vsub.f32 1.0, %v524
        %v526 = vmul.f32 %v523, %v525
        %v527 = vadd.f32 %v523, %v526
        %vm528 = vweird.f32 %v522
        %vm529 = vweird.f32 %v523
        %vm530 = vmor %vm528, %vm529
        %v531 = vsel %vm530, %v523, %v527
        %v532 = vand.u32 2147483647, %v522
        %vm533 = vcmp.eq.f32.partialorder %v532, 8.507059e+37
        %v534 = vand.u32 %v522, 2147483648
        %v535 = vor.u32 1.1754944e-38, %v534
        %v536 = vsel %vm533, %v535, %v531
        %v537 = vmul.f32 1.0, %v536
        %v538 = vmul.f32 %v372, %v537
        %v539 = vmul.f32 %v538, %v538
        %v540 = vsel %vm381, %v539, 0.0
        %541 = vadd.xlane.f32.xlu0 %v540
        %v542 = vpop.xlane.xlu0 %541
        %v543 = vmax.f32 %v542, 1e-24
        %v544 = vrsqrt.pop %v543
        %v545 = vmul.f32 %v544, %v543
        %v546 = vmul.f32 %v545, %v544
        %v547 = vmul.f32 0.5, %v546
        %v548 = vsub.f32 1.5, %v547
        %v549 = vmul.f32 %v544, %v548
        %vm550 = vweird.f32 %v543
        %vm551 = vweird.f32 %v544
        %vm552 = vmor %vm550, %vm551
        %v553 = vsel %vm552, %v544, %v549
        %v554 = vmul.f32 %v538, %v553
        %v555 = vld [vmem:[#allocation2] sm:$0xff]
        %v556 = vld [vmem:[#allocation2 + $0x8] sm:$0xff]
        %v557 = vld [vmem:[#allocation2 + $0x10] sm:$0xff]
        %v558 = vld [vmem:[#allocation2 + $0x18] sm:$0xff]
        %v559 = vld [vmem:[#allocation2 + $0x20] sm:$0xff]
        %v560 = vld [vmem:[#allocation2 + $0x28] sm:$0xff]
        %v561 = vld [vmem:[#allocation2 + $0x30] sm:$0xff]
        %v562 = vld [vmem:[#allocation2 + $0x38] sm:$0xff]
        %v563 = vld [vmem:[#allocation2 + $0x40] sm:$0xff]
        %v564 = vld [vmem:[#allocation2 + $0x48] sm:$0xff]
        %v565 = vld [vmem:[#allocation2 + $0x50] sm:$0xff]
        %v566 = vld [vmem:[#allocation2 + $0x58] sm:$0xff]
        %v567 = vld [vmem:[#allocation2 + $0x60] sm:$0xff]
        %v568 = vld [vmem:[#allocation2 + $0x68] sm:$0xff]
        %v569 = vld [vmem:[#allocation2 + $0x70] sm:$0xff]
        %v570 = vld [vmem:[#allocation2 + $0x78] sm:$0xff]
        %v571 = vld [vmem:[#allocation2 + $0x80] sm:$0xff]
        %v572 = vld [vmem:[#allocation2 + $0x88] sm:$0xff]
        %v573 = vld [vmem:[#allocation2 + $0x90] sm:$0xff]
        %v574 = vld [vmem:[#allocation2 + $0x98] sm:$0xff]
        %v576 = vsel %vm381, %v554, 0
        %578 = vmatpush.msra.mxu0 0.0
        %579 = vmatpush.msra.mxu0 0.0
        %580 = vmatpush.msra.mxu0 0.0
        %581 = vmatpush.msra.mxu0 0.0
        %582 = vmatpush.msra.mxu0 0.0
        %583 = vmatpush.msra.mxu0 0.0
        %584 = vmatpush.msra.mxu0 0.0
        %585 = vmatpush.msra.mxu0 0.0
        %586 = vmatpush.msra.mxu0 0.0
        %587 = vmatpush.msra.mxu0 0.0
        %588 = vmatpush.msra.mxu0 0.0
        %589 = vmatpush.msra.mxu0 0.0
        %590 = vmatpush.msra.mxu0 %v570
        %591 = vmatpush.msra.mxu0 %v565
        %592 = vmatpush.msra.mxu0 %v560
        %593 = vmatpush.msra.mxu0 %v555
        %594 = vmatmul.f32.gmra.mxu0 %v576
        %v595 = vpop.f32.mrf.mxu0
        %v596 = vadd.f32 0.0, %v595
        %597 = vdwg.mxu0
        %598 = vmatpush.msra.mxu0 0.0
        %599 = vmatpush.msra.mxu0 0.0
        %600 = vmatpush.msra.mxu0 0.0
        %601 = vmatpush.msra.mxu0 0.0
        %602 = vmatpush.msra.mxu0 0.0
        %603 = vmatpush.msra.mxu0 0.0
        %604 = vmatpush.msra.mxu0 0.0
        %605 = vmatpush.msra.mxu0 0.0
        %606 = vmatpush.msra.mxu0 0.0
        %607 = vmatpush.msra.mxu0 0.0
        %608 = vmatpush.msra.mxu0 0.0
        %609 = vmatpush.msra.mxu0 0.0
        %610 = vmatpush.msra.mxu0 %v571
        %611 = vmatpush.msra.mxu0 %v566
        %612 = vmatpush.msra.mxu0 %v561
        %613 = vmatpush.msra.mxu0 %v556
        %614 = vmatmul.f32.gmra.mxu0 %v576
        %v615 = vpop.f32.mrf.mxu0
        %v616 = vadd.f32 0.0, %v615
        %617 = vdwg.mxu0
        %618 = vmatpush.msra.mxu0 0.0
        %619 = vmatpush.msra.mxu0 0.0
        %620 = vmatpush.msra.mxu0 0.0
        %621 = vmatpush.msra.mxu0 0.0
        %622 = vmatpush.msra.mxu0 0.0
        %623 = vmatpush.msra.mxu0 0.0
        %624 = vmatpush.msra.mxu0 0.0
        %625 = vmatpush.msra.mxu0 0.0
        %626 = vmatpush.msra.mxu0 0.0
        %627 = vmatpush.msra.mxu0 0.0
        %628 = vmatpush.msra.mxu0 0.0
        %629 = vmatpush.msra.mxu0 0.0
        %630 = vmatpush.msra.mxu0 %v572
        %631 = vmatpush.msra.mxu0 %v567
        %632 = vmatpush.msra.mxu0 %v562
        %633 = vmatpush.msra.mxu0 %v557
        %634 = vmatmul.f32.gmra.mxu0 %v576
        %v635 = vpop.f32.mrf.mxu0
        %v636 = vadd.f32 0.0, %v635
        %637 = vdwg.mxu0
        %638 = vmatpush.msra.mxu0 0.0
        %639 = vmatpush.msra.mxu0 0.0
        %640 = vmatpush.msra.mxu0 0.0
        %641 = vmatpush.msra.mxu0 0.0
        %642 = vmatpush.msra.mxu0 0.0
        %643 = vmatpush.msra.mxu0 0.0
        %644 = vmatpush.msra.mxu0 0.0
        %645 = vmatpush.msra.mxu0 0.0
        %646 = vmatpush.msra.mxu0 0.0
        %647 = vmatpush.msra.mxu0 0.0
        %648 = vmatpush.msra.mxu0 0.0
        %649 = vmatpush.msra.mxu0 0.0
        %650 = vmatpush.msra.mxu0 %v573
        %651 = vmatpush.msra.mxu0 %v568
        %652 = vmatpush.msra.mxu0 %v563
        %653 = vmatpush.msra.mxu0 %v558
        %654 = vmatmul.f32.gmra.mxu0 %v576
        %v655 = vpop.f32.mrf.mxu0
        %v656 = vadd.f32 0.0, %v655
        %657 = vdwg.mxu0
        %658 = vmatpush.msra.mxu0 0.0
        %659 = vmatpush.msra.mxu0 0.0
        %660 = vmatpush.msra.mxu0 0.0
        %661 = vmatpush.msra.mxu0 0.0
        %662 = vmatpush.msra.mxu0 0.0
        %663 = vmatpush.msra.mxu0 0.0
        %664 = vmatpush.msra.mxu0 0.0
        %665 = vmatpush.msra.mxu0 0.0
        %666 = vmatpush.msra.mxu0 0.0
        %667 = vmatpush.msra.mxu0 0.0
        %668 = vmatpush.msra.mxu0 0.0
        %669 = vmatpush.msra.mxu0 0.0
        %670 = vmatpush.msra.mxu0 %v574
        %671 = vmatpush.msra.mxu0 %v569
        %672 = vmatpush.msra.mxu0 %v564
        %673 = vmatpush.msra.mxu0 %v559
        %674 = vmatmul.f32.gmra.mxu0 %v576
        %v675 = vpop.f32.mrf.mxu0
        %v676 = vadd.f32 0.0, %v675
        %677 = vdwg.mxu0
        %v678 = vmax.f32 %v596, %v616
        %v679 = vmax.f32 %v678, %v636
        %v680 = vmax.f32 %v679, %v656
        %v681 = vmax.f32 %v680, %v676
        %v682 = vld [vmem:[%s8] sm:$0xff]
        %v683 = vld [vmem:[%s8 + $0x8] sm:$0xff]
        %v684 = vld [vmem:[%s8 + $0x10] sm:$0xff]
        %v685 = vld [vmem:[%s8 + $0x18] sm:$0xff]
        %v686 = vld [vmem:[%s8 + $0x20] sm:$0xff]
        %v687 = vld [vmem:[%s8 + $0x28] sm:$0xff]
        %v688 = vld [vmem:[%s8 + $0x30] sm:$0xff]
        %v689 = vld [vmem:[%s8 + $0x38] sm:$0xff]
        %v690 = vld [vmem:[%s8 + $0x40] sm:$0xff]
        %v691 = vld [vmem:[%s8 + $0x48] sm:$0xff]
        %v692 = vld [vmem:[%s8 + $0x50] sm:$0xff]
        %v693 = vld [vmem:[%s8 + $0x58] sm:$0xff]
        %v694 = vld [vmem:[%s8 + $0x60] sm:$0xff]
        %v695 = vld [vmem:[%s8 + $0x68] sm:$0xff]
        %v696 = vld [vmem:[%s8 + $0x70] sm:$0xff]
        %v697 = vld [vmem:[%s8 + $0x78] sm:$0xff]
        %v698 = vld [vmem:[%s9] sm:$0x1]
        %v700 = vperm.slane %v698, 0
        %702 = vmatpush.msra.mxu0 %v697
        %703 = vmatpush.msra.mxu0 %v696
        %704 = vmatpush.msra.mxu0 %v695
        %705 = vmatpush.msra.mxu0 %v694
        %706 = vmatpush.msra.mxu0 %v693
        %707 = vmatpush.msra.mxu0 %v692
        %708 = vmatpush.msra.mxu0 %v691
        %709 = vmatpush.msra.mxu0 %v690
        %710 = vmatpush.msra.mxu0 %v689
        %711 = vmatpush.msra.mxu0 %v688
        %712 = vmatpush.msra.mxu0 %v687
        %713 = vmatpush.msra.mxu0 %v686
        %714 = vmatpush.msra.mxu0 %v685
        %715 = vmatpush.msra.mxu0 %v684
        %716 = vmatpush.msra.mxu0 %v683
        %717 = vmatpush.msra.mxu0 %v682
        %718 = vmatmul.f32.gmra.mxu0 %v681
        %v719 = vpop.f32.mrf.mxu0
        %v720 = vadd.f32 %v700, %v719
        %721 = vdwg.mxu0
        %vm722 = vcmask 130048
        %723 = vst.msk [vmem:[%s367] sm:$0xff] %vm722, %v720
        %s724 = sand.u32 %s248, 1
        %s725 = scalar_lea.sflag [#allocation4], %s724
        %s726 = sand.u32 %s248, 1
        %s727 = smul.addr %s726, 8
        %s728 = scalar_lea.vmem [#allocation5], %s727
        // Predicated region
        $region65: #{tpu_custom_call.1} parent=59 // pred_check
          %p729 = pneg %p258
        $region66: #{tpu_custom_call.1} parent=59 // pred_check_branch
          %731 = sbr.rel (%p729) target = $region68
        $region67: #{tpu_custom_call.1} parent=59 // pred_region
          %733 = vsyncadd %s725, 0
          %s734 = smul.addr %s25, 8
          %s735 = scalar_lea.hbm %s10, %s734
          %s737 = sshll.u32 %s728, 4
          %s738 = int_to_ptr.vmem [resolvable:$true] %s737
          %s739 = sshll.u32 %s735, 4
          %s740 = int_to_ptr.hbm [resolvable:$true] %s739
          %742 = dma.vmem_to_hbm [thread:$0]  %s738, 128, %s740, %s725
        $region68: #{tpu_custom_call.1} parent=59 // pred_fallthru
          _
      $region60: #{tpu_custom_call.1} parent=5 // pred_fallthru
        _
      %p743 = scmp.le.s32.totalorder 2, %s20
      // Predicated region
      $region69: #{tpu_custom_call.1} parent=5 // pred_check
        %p744 = pneg %p743
      $region70: #{tpu_custom_call.1} parent=5 // pred_check_branch
        %746 = sbr.rel (%p744) target = $region72
      $region71: #{tpu_custom_call.1} parent=5 // pred_region
        %s747 = ssub.s32 %s20, 2
        // Predicated region
        $region73: #{tpu_custom_call.1} parent=71 // pred_check
          %p748 = pneg %p264
        $region74: #{tpu_custom_call.1} parent=71 // pred_check_branch
          %750 = sbr.rel (%p748) target = $region76
        $region75: #{tpu_custom_call.1} parent=71 // pred_region
          %s751 = sand.u32 %s249, 1
          %s752 = scalar_lea.sflag [#allocation4], %s751
          %s753 = sand.u32 %s249, 1
          %s754 = smul.addr %s753, 8
          %s755 = scalar_lea.vmem [#allocation5], %s754
          %757 = dma.done %s752, 128
        $region76: #{tpu_custom_call.1} parent=71 // pred_fallthru
          _
      $region72: #{tpu_custom_call.1} parent=5 // pred_fallthru
        _
    $region6: #{tpu_custom_call.1} parent=1 // loop_footer
      %s24 = sadd.s32 1, %s20
    $region7: #{tpu_custom_call.1} parent=1 // loop_footer_branch
      %19 = sbr.rel target = $region3
    $region8: #{tpu_custom_call.1} parent=1 // loop_exit
      _
    %758 = vsyncpa [#allocation3], 1
    %s759 = scalar_lea.sflag [#allocation3], 1
    %760 = vsyncpa %s759, 1
    %761 = vsyncpa [#allocation4], 1
    %s762 = scalar_lea.sflag [#allocation4], 1
    %763 = vsyncpa %s762, 1

</llo_original>
